<compile_context>
chip_gen: v7x
topology: tpu7x:2x2x1
jax: 0.10.0
libtpu: 0.0.40
codegen_flags: <defaults>
</compile_context>

<pallas_src>
import functools
import math

import jax
import jax.numpy as jnp
from jax.experimental import pallas as pl
from jax.experimental.pallas import tpu as pltpu

LANE = 128      # last-dim tiles must be multiples of 128 (lane-dense stores)
SUBLANE = 16    # safe second-minor multiple for both f32 and bf16 tiles


def _round_up(a, b):
    return ((a + b - 1) // b) * b


def _vmem_cap_bytes():
    """Generation-aware VMEM budget with headroom (v7x ~48 MiB, v5e/v6e ~96 MiB)."""
    try:
        info = pltpu.get_tpu_info()
        phys = int(getattr(info, "vmem_capacity_bytes", 0)) or (64 << 20)
    except Exception:
        phys = 64 << 20  # conservative fallback: assume v7x-sized VMEM
    return min(int(phys * 0.75), 100 << 20)


def _skip_linear_kernel(x_ref, w_ref, b_ref, o_ref, *, tile_n, matmul_dtype):
    # x_ref: (tile_m, N_pad) in x's dtype -- MXU operand AND residual source
    # w_ref: (N_pad, tile_n) matmul_dtype   b_ref: (1, tile_n) f32
    # o_ref: (tile_m, tile_n) out dtype
    j = pl.program_id(1)
    col = pl.multiple_of(j * tile_n, LANE)
    # Residual comes from the same VMEM tile as the MXU operand: x is streamed
    # from HBM exactly once per (i, j) block and the residual keeps full
    # precision (only the matmul operand is cast down).
    res = x_ref[:, pl.ds(col, tile_n)].astype(jnp.float32)
    acc = jnp.dot(x_ref[...].astype(matmul_dtype), w_ref[...],
                  preferred_element_type=jnp.float32)
    o_ref[...] = (res + b_ref[...] + acc).astype(o_ref.dtype)


def prepare_skip_linear_params(w, b, *, matmul_dtype=jnp.bfloat16,
                               max_tile_n=512):
    """Pad/cast the static Linear(H, H) parameters once (hoist out of the hot path).

    w is stored pre-transposed: the kernel computes x @ w (== x @ W.T in torch).
    """
    H = int(w.shape[0])
    assert w.shape == (H, H) and b.shape == (H,)
    # Lane-dense output tile; capping at 512 keeps >=2 N blocks for H >= 1024
    # (megacore work-split) while staying a multiple of 128.
    tile_n = min(_round_up(H, LANE), max_tile_n)
    n_pad = _round_up(H, tile_n)
    w_p = w
    if n_pad != H:
        w_p = jnp.pad(w_p, ((0, n_pad - H), (0, n_pad - H)))
    w_p = w_p.astype(matmul_dtype)
    b_p = b.astype(jnp.float32)
    if n_pad != H:
        b_p = jnp.pad(b_p, (0, n_pad - H))
    b_p = b_p.reshape(1, n_pad)
    return dict(w=w_p, b=b_p, H=H, n_pad=n_pad, tile_n=tile_n,
                matmul_dtype=matmul_dtype)


def skip_connection_apply(x, params):
    """out = x + (x @ W + b) for x: [..., H], using pre-prepared params."""
    w_p, b_p = params["w"], params["b"]
    H, n_pad = params["H"], params["n_pad"]
    tile_n = params["tile_n"]
    matmul_dtype = params["matmul_dtype"]
    assert x.shape[-1] == H

    out_dtype = x.dtype
    M = 1
    for d in x.shape[:-1]:
        M *= int(d)
    K = n_pad  # contraction width of the padded slab (extra cols/rows are zero)

    x_bytes = jnp.dtype(x.dtype).itemsize
    out_bytes = jnp.dtype(out_dtype).itemsize
    mm_bytes = jnp.dtype(matmul_dtype).itemsize

    vmem_cap = _vmem_cap_bytes()

    def vmem_bytes(tm, tn):
        # double-buffered x / W / bias / output tiles; no accumulator scratch
        return (2 * tm * K * x_bytes + 2 * K * tn * mm_bytes
                + 2 * 8 * tn * 4 + 2 * tm * tn * out_bytes)

    # Big tiles: start at tile_m=1024 and shrink only if the VMEM cap demands.
    tile_m = min(1024, _round_up(M, SUBLANE))
    while vmem_bytes(tile_m, tile_n) > vmem_cap and tile_m > SUBLANE:
        tile_m = max(SUBLANE, (tile_m // 2 // SUBLANE) * SUBLANE)
    while vmem_bytes(tile_m, tile_n) > vmem_cap and tile_n > LANE:
        if n_pad % (tile_n // 2):
            break
        tile_n //= 2
    # TODO(synk): for extreme H (panels too big even at minimal tiles) a
    # K-tiled accumulator path would be preferable; typical transformer
    # widths always fit a single-K block.

    M_pad = _round_up(M, tile_m)

    # v7x megacore: if M fits one row block, split N across the two cores.
    if (M_pad // tile_m == 1 and n_pad // tile_n == 1
            and n_pad % (2 * LANE) == 0):
        tile_n = n_pad // 2

    x2 = x.reshape(M, H)
    if (M_pad, n_pad) != (M, H):
        x2 = jnp.pad(x2, ((0, M_pad - M), (0, n_pad - H)))

    grid = (M_pad // tile_m, n_pad // tile_n)

    vmem_limit = min(vmem_cap,
                     max(int(1.25 * vmem_bytes(tile_m, tile_n)) + (1 << 20),
                         16 << 20))

    cost = pl.CostEstimate(
        flops=2 * M_pad * n_pad * K,
        transcendentals=0,
        bytes_accessed=(M_pad * K * x_bytes * grid[1]      # x restream per N block
                        + K * n_pad * mm_bytes * grid[0]   # W restream per M block
                        + M_pad * n_pad * out_bytes),
    )

    kernel = functools.partial(_skip_linear_kernel, tile_n=tile_n,
                               matmul_dtype=matmul_dtype)

    out = pl.pallas_call(
        kernel,
        out_shape=jax.ShapeDtypeStruct((M_pad, n_pad), out_dtype),
        grid_spec=pltpu.PrefetchScalarGridSpec(
            num_scalar_prefetch=0,
            grid=grid,
            in_specs=[
                pl.BlockSpec((tile_m, n_pad), lambda i, j: (i, 0)),  # x slab
                pl.BlockSpec((n_pad, tile_n), lambda i, j: (0, j)),  # W (bf16)
                pl.BlockSpec((1, tile_n), lambda i, j: (0, j)),      # bias (f32)
            ],
            out_specs=pl.BlockSpec((tile_m, tile_n), lambda i, j: (i, j)),
        ),
        compiler_params=pltpu.CompilerParams(
            dimension_semantics=("parallel", "parallel"),
            vmem_limit_bytes=vmem_limit,
        ),
        cost_estimate=cost,
        # NOTE: no input_output_aliases -- the output must never clobber the
        # shared x slab, which later (i, j) blocks still read as MXU operand.
    )(x2, w_p, b_p)

    # Padded rows/cols (they hold the bias broadcast, not zeros) are sliced
    # off here -- do not remove this slice.
    if (M_pad, n_pad) != (M, H):
        out = out[:M, :H]
    return out.reshape(x.shape)


def skip_connection(x, w, b, *, matmul_dtype=jnp.bfloat16):
    """One-shot convenience wrapper. In a real model, call
    prepare_skip_linear_params once and reuse the result across forwards."""
    return skip_connection_apply(
        x, prepare_skip_linear_params(w, b, matmul_dtype=matmul_dtype))


if __name__ == "__main__":
    key = jax.random.PRNGKey(0)
    kx, kw, kb = jax.random.split(key, 3)

    batch, seq, hidden = 2, 8, 32
    x = jax.random.normal(kx, (batch, seq, hidden), dtype=jnp.float32)

    # Deterministic Linear(hidden, hidden) params (PyTorch-style uniform init).
    # w is stored pre-transposed so the kernel computes x @ w (== x @ W.T in torch).
    bound = 1.0 / math.sqrt(hidden)
    w = jax.random.uniform(kw, (hidden, hidden), minval=-bound, maxval=bound,
                           dtype=jnp.float32)
    b = jax.random.uniform(kb, (hidden,), minval=-bound, maxval=bound,
                           dtype=jnp.float32)

    # Static params padded/cast ONCE, outside the per-call hot path.
    params = prepare_skip_linear_params(w, b)
    fwd = jax.jit(functools.partial(skip_connection_apply, params=params))

    out = jax.block_until_ready(fwd(x))

    # Reference with the same matmul precision as the kernel
    # (bf16 MXU operands, f32 accumulation, f32 residual/bias add).
    ref_mm = x + (
        jnp.einsum(
            "bsh,hk->bsk",
            x.astype(jnp.bfloat16),
            w.astype(jnp.bfloat16),
            preferred_element_type=jnp.float32,
        )
        + b
    )
    assert jnp.allclose(out, ref_mm, atol=1e-3, rtol=1e-3), \
        "mismatch vs bf16-matmul reference"

    # Loose check against the full-f32 reference (bf16 matmul rounding only).
    ref_f32 = x + (jnp.einsum("bsh,hk->bsk", x, w) + b)
    assert jnp.allclose(out, ref_f32, atol=1e-1, rtol=1e-1), \
        "mismatch vs f32 reference"

    print("KERNEL_OK")
</pallas_src>

<mosaic_0001>
module attributes {stable_mosaic.version = 11 : i64} {
  func.func @_skip_linear_kernel(%arg0: i32, %arg1: i32, %arg2: memref<16x128xf32, #tpu.memory_space<vmem>>, %arg3: memref<128x128xbf16, #tpu.memory_space<vmem>>, %arg4: memref<1x128xf32, #tpu.memory_space<vmem>>, %arg5: memref<16x128xf32, #tpu.memory_space<vmem>>) attributes {dimension_semantics = [#tpu.dimension_semantics<parallel>, #tpu.dimension_semantics<parallel>], iteration_bounds = array<i64: 1, 1>, scalar_prefetch = 0 : i64, scratch_operands = 0 : i64, tpu.core_type = #tpu.core_type<tc>, window_params = [{transform_indices = @transform_0, window_bounds = array<i64: 16, 128>}, {transform_indices = @transform_1, window_bounds = array<i64: 128, 128>}, {transform_indices = @transform_2, window_bounds = array<i64: 1, 128>}, {transform_indices = @transform_3, window_bounds = array<i64: 16, 128>}]} {
    %c128_i32 = arith.constant 128 : i32
    %0 = arith.muli %arg1, %c128_i32 : i32
    %1 = tpu.assume_multiple %0, 128 : i32
    %c0 = arith.constant 0 : index
    %2 = arith.index_cast %1 : i32 to index
    %3 = vector.load %arg2[%c0, %2] : memref<16x128xf32, #tpu.memory_space<vmem>>, vector<16x128xf32>
    %c0_0 = arith.constant 0 : index
    %c0_1 = arith.constant 0 : index
    %4 = vector.load %arg2[%c0_0, %c0_1] : memref<16x128xf32, #tpu.memory_space<vmem>>, vector<16x128xf32>
    %5 = arith.truncf %4 : vector<16x128xf32> to vector<16x128xbf16>
    %c0_2 = arith.constant 0 : index
    %c0_3 = arith.constant 0 : index
    %6 = vector.load %arg3[%c0_2, %c0_3] : memref<128x128xbf16, #tpu.memory_space<vmem>>, vector<128x128xbf16>
    %cst = arith.constant dense<0.000000e+00> : vector<16x128xf32>
    %7 = tpu.matmul %5, %6, %cst {dimension_numbers = #tpu.dot_dimension_numbers<[1], [0], [0], [1], [0, 0, 1, 1], [], []>} : vector<16x128xbf16>, vector<128x128xbf16>, vector<16x128xf32> -> vector<16x128xf32>
    %c0_4 = arith.constant 0 : index
    %c0_5 = arith.constant 0 : index
    %8 = vector.load %arg4[%c0_4, %c0_5] : memref<1x128xf32, #tpu.memory_space<vmem>>, vector<1x128xf32>
    %9 = vector.broadcast %8 : vector<1x128xf32> to vector<16x128xf32>
    %10 = arith.addf %3, %9 : vector<16x128xf32>
    %11 = arith.addf %10, %7 : vector<16x128xf32>
    %c0_6 = arith.constant 0 : index
    %c0_7 = arith.constant 0 : index
    %12 = vector.load %arg5[%c0_6, %c0_7] : memref<16x128xf32, #tpu.memory_space<vmem>>, vector<16x128xf32>
    tpu.vector_store %arg5[%c0_6, %c0_7], %11 {strides = array<i32>} : memref<16x128xf32, #tpu.memory_space<vmem>>, vector<16x128xf32>,
    return
  }
  func.func @transform_0(%arg0: i32, %arg1: i32) -> (i32, i32) {
    %c0_i32 = arith.constant 0 : i32
    %c0_i32_0 = arith.constant 0 : i32
    return %arg0, %c0_i32 : i32, i32
  }
  func.func @transform_1(%arg0: i32, %arg1: i32) -> (i32, i32) {
    %c0_i32 = arith.constant 0 : i32
    %c0_i32_0 = arith.constant 0 : i32
    return %c0_i32, %arg1 : i32, i32
  }
  func.func @transform_2(%arg0: i32, %arg1: i32) -> (i32, i32) {
    %c0_i32 = arith.constant 0 : i32
    %c0_i32_0 = arith.constant 0 : i32
    return %c0_i32, %arg1 : i32, i32
  }
  func.func @transform_3(%arg0: i32, %arg1: i32) -> (i32, i32) {
    %c0_i32 = arith.constant 0 : i32
    return %arg0, %arg1 : i32, i32
  }
}

</mosaic_0001>

<llo_original>
// kernel: skip_connection_apply.1
$region0: #{skip_connection_apply.1}
  #allocation0 [shape = 'u32[]', space=smem, size = 0x4, offset = 0x4, fixed_abs, tag = 'smem constant byte address 0x4 - core index']
  #allocation1 [shape = 'u32[144,128]{1,0:T(1,128)}', space=vmem, size = 0x12000, scoped, tag = 'internal scratch']
  %s0 = inlined_call_operand.vmem [shape: f32[16,128], index: 0, kind: input, shape index: {}]
  %s1 = inlined_call_operand.hbm [shape: bf16[128,128], index: 1, kind: input, shape index: {}]
  %s2 = inlined_call_operand.vmem [shape: f32[1,128], index: 2, kind: input, shape index: {}]
  %s3 = inlined_call_operand.vmem [shape: f32[16,128], index: 3, kind: output, shape index: {}]
  %s4 = sld [smem:[#allocation0]]
  $region26: #{skip_connection_apply.1} parent=0
    _
  %s6 = ssub.s32 1, %s4
  %s7 = scalar_select 0, %s6, %s4
  $region1: #{skip_connection_apply.1} parent=0
    #allocation2 [shape = 'u8[32768]{0}', space=vmem, size = 0x8000, scoped, tag = 'input window, operand 1, single buffered']
    #allocation3 [shape = 's32[1]{0}', space=sflag, size = 0x4, scoped, tag = 'scoped memory for skip_connection_apply.1']
    %8 = vsyncpa [#allocation3], 0
    // Predicated region
    $region2: #{skip_connection_apply.1} parent=1 // pred_check
      _
    $region3: #{skip_connection_apply.1} parent=1 // pred_check_branch
      %10 = sbr.rel (0) target = $region5
    $region4: #{skip_connection_apply.1} parent=1 // pred_region
      _
    $region5: #{skip_connection_apply.1} parent=1 // pred_fallthru
      _
    // Predicated region
    $region6: #{skip_connection_apply.1} parent=1 // pred_check
      _
    $region7: #{skip_connection_apply.1} parent=1 // pred_check_branch
      %12 = sbr.rel (0) target = $region9
    $region8: #{skip_connection_apply.1} parent=1 // pred_region
      %s14 = ssub.s32 1024, 1024
      %15 = vsyncadd [#allocation3], %s14
      %s16 = sshll.u32 [#allocation2], 4
      %s17 = int_to_ptr.vmem [resolvable:$true] %s16
      %22 = dma.hbm_to_vmem [thread:$0]  %s1, 1024, %s17, [#allocation3], 64, 64, 4
    $region9: #{skip_connection_apply.1} parent=1 // pred_fallthru
      _
    // Predicated region
    $region10: #{skip_connection_apply.1} parent=1 // pred_check
      _
    $region11: #{skip_connection_apply.1} parent=1 // pred_check_branch
      %24 = sbr.rel (0) target = $region13
    $region12: #{skip_connection_apply.1} parent=1 // pred_region
      _
    $region13: #{skip_connection_apply.1} parent=1 // pred_fallthru
      _
    // Predicated region
    $region14: #{skip_connection_apply.1} parent=1 // pred_check
      _
    $region15: #{skip_connection_apply.1} parent=1 // pred_check_branch
      %26 = sbr.rel (0) target = $region17
    $region16: #{skip_connection_apply.1} parent=1 // pred_region
      %27 = dma.done [#allocation3], 1024
    $region17: #{skip_connection_apply.1} parent=1 // pred_fallthru
      _
    %s29 = smul.u32 0, 128
    %s30 = sshra.s32 %s29, 7
    %s31 = sand.u32 %s29, 127
    %s32 = scalar_lea.vmem %s0, %s30
    %v33 = vld [vmem:[%s32] sm:$0xff]
    %v34 = vld [vmem:[%s32 + $0x8] sm:$0xff]
    %v35 = vld [vmem:[%s0] sm:$0xff]
    %v36 = vld [vmem:[%s0 + $0x8] sm:$0xff]
    %v37 = vpack.c.bf16 %v36, %v35
    %v38 = vld [vmem:[#allocation2] sm:$0xf]
    %v39 = vld [vmem:[#allocation2 + $0x4] sm:$0xf]
    %v40 = vld [vmem:[#allocation2 + $0x8] sm:$0xf]
    %v41 = vld [vmem:[#allocation2 + $0xc] sm:$0xf]
    %v42 = vld [vmem:[#allocation2 + $0x10] sm:$0xf]
    %v43 = vld [vmem:[#allocation2 + $0x14] sm:$0xf]
    %v44 = vld [vmem:[#allocation2 + $0x18] sm:$0xf]
    %v45 = vld [vmem:[#allocation2 + $0x1c] sm:$0xf]
    %v46 = vld [vmem:[#allocation2 + $0x20] sm:$0xf]
    %v47 = vld [vmem:[#allocation2 + $0x24] sm:$0xf]
    %v48 = vld [vmem:[#allocation2 + $0x28] sm:$0xf]
    %v49 = vld [vmem:[#allocation2 + $0x2c] sm:$0xf]
    %v50 = vld [vmem:[#allocation2 + $0x30] sm:$0xf]
    %v51 = vld [vmem:[#allocation2 + $0x34] sm:$0xf]
    %v52 = vld [vmem:[#allocation2 + $0x38] sm:$0xf]
    %v53 = vld [vmem:[#allocation2 + $0x3c] sm:$0xf]
    %v70 = vunpack.c.l.b16 %v38
    %v71 = vunpack.c.l.b16 %v39
    %v72 = vunpack.c.l.b16 %v40
    %v73 = vunpack.c.l.b16 %v41
    %v74 = vunpack.c.l.b16 %v42
    %v75 = vunpack.c.l.b16 %v43
    %v76 = vunpack.c.l.b16 %v44
    %v77 = vunpack.c.l.b16 %v45
    %v78 = vunpack.c.l.b16 %v46
    %v79 = vunpack.c.l.b16 %v47
    %v80 = vunpack.c.l.b16 %v48
    %v81 = vunpack.c.l.b16 %v49
    %v82 = vunpack.c.l.b16 %v50
    %v83 = vunpack.c.l.b16 %v51
    %v84 = vunpack.c.l.b16 %v52
    %v85 = vunpack.c.l.b16 %v53
    %v86 = vpack.c.b16 %v71, %v70
    %v87 = vpack.c.b16 %v73, %v72
    %v88 = vpack.c.b16 %v75, %v74
    %v89 = vpack.c.b16 %v77, %v76
    %v90 = vpack.c.b16 %v79, %v78
    %v91 = vpack.c.b16 %v81, %v80
    %v92 = vpack.c.b16 %v83, %v82
    %v93 = vpack.c.b16 %v85, %v84
    %102 = vmatprep.subr.bf16.mxu0 0
    %103 = vmatpush1.bf16.msra.mxu0 %v86
    %104 = vmatprep.subr.bf16.mxu0 0
    %105 = vmatpush1.bf16.msra.mxu0 %v87
    %106 = vmatprep.subr.bf16.mxu0 0
    %107 = vmatpush1.bf16.msra.mxu0 %v88
    %108 = vmatprep.subr.bf16.mxu0 0
    %109 = vmatpush1.bf16.msra.mxu0 %v89
    %110 = vmatprep.subr.bf16.mxu0 0
    %111 = vmatpush1.bf16.msra.mxu0 %v90
    %112 = vmatprep.subr.bf16.mxu0 0
    %113 = vmatpush1.bf16.msra.mxu0 %v91
    %114 = vmatprep.subr.bf16.mxu0 0
    %115 = vmatpush1.bf16.msra.mxu0 %v92
    %116 = vmatprep.subr.bf16.mxu0 0
    %117 = vmatpush1.bf16.msra.mxu0 %v93
    %118 = vmatprep.subr.bf16.mxu0 0
    %119 = vmatpush1.bf16.msra.mxu0 0
    %120 = vmatprep.subr.bf16.mxu0 0
    %121 = vmatpush1.bf16.msra.mxu0 0
    %122 = vmatprep.subr.bf16.mxu0 0
    %123 = vmatpush1.bf16.msra.mxu0 0
    %124 = vmatprep.subr.bf16.mxu0 0
    %125 = vmatpush1.bf16.msra.mxu0 0
    %126 = vmatprep.subr.bf16.mxu0 0
    %127 = vmatpush1.bf16.msra.mxu0 0
    %128 = vmatprep.subr.bf16.mxu0 0
    %129 = vmatpush1.bf16.msra.mxu0 0
    %130 = vmatprep.subr.bf16.mxu0 0
    %131 = vmatpush1.bf16.msra.mxu0 0
    %132 = vmatprep.subr.bf16.mxu0 0
    %133 = vmatpush1.bf16.msra.mxu0 0
    %134 = vmatprep.mubr.bf16.mxu0 0
    %135 = vmatmul.mubr.bf16.gmra.mrb[0].mxu0 %v37
    %v136 = vpop.f32.mrb[0].mxu0
    %v137 = vadd.f32 0.0, %v136
    %v138 = vpop.f32.mrb[0].mxu0
    %v139 = vpop.f32.mrb[0].mxu0
    %v140 = vadd.f32 0.0, %v139
    %v141 = vpop.f32.mrb[0].mxu0
    %142 = vdwg.mxu0
    %v143 = vld [vmem:[%s2] sm:$0x1]
    %v145 = vlaneseq
    %v146 = vshrl.u32 %v145, 7
    %v147 = vsub.s32 0, %v146
    %v148 = vrot.slane %v143, %v147
    %v150 = vadd.f32 %v33, %v148
    %v151 = vadd.f32 %v34, %v148
    %v152 = vadd.f32 %v150, %v137
    %v153 = vadd.f32 %v151, %v140
    %154 = vst [vmem:[%s3] sm:$0xff] %v152
    %155 = vst [vmem:[%s3 + $0x8] sm:$0xff] %v153
    // Predicated region
    $region18: #{skip_connection_apply.1} parent=1 // pred_check
      _
    $region19: #{skip_connection_apply.1} parent=1 // pred_check_branch
      %157 = sbr.rel (0) target = $region21
    $region20: #{skip_connection_apply.1} parent=1 // pred_region
      _
    $region21: #{skip_connection_apply.1} parent=1 // pred_fallthru
      _
    // Predicated region
    $region22: #{skip_connection_apply.1} parent=1 // pred_check
      _
    $region23: #{skip_connection_apply.1} parent=1 // pred_check_branch
      %159 = sbr.rel (0) target = $region25
    $region24: #{skip_connection_apply.1} parent=1 // pred_region
      _
    $region25: #{skip_connection_apply.1} parent=1 // pred_fallthru
      _
    %160 = vsyncpa [#allocation3], 1

</llo_original>
